<compile_context>
chip_gen: v7x
topology: tpu7x:2x2x1
jax: 0.10.0
libtpu: 0.0.40
codegen_flags: <defaults>
</compile_context>

<pallas_src>
import jax
import jax.numpy as jnp
from jax.experimental import pallas as pl
from jax.experimental.pallas import tpu as pltpu

BN_EPS = 1e-5
LANE = 128
SUBLANE = 8


def _round_up(v, m):
    return ((v + m - 1) // m) * m


def _pad2d(a, rows=None, cols=None):
    r = a.shape[0] if rows is None else rows
    c = a.shape[1] if cols is None else cols
    return jnp.pad(a, ((0, r - a.shape[0]), (0, c - a.shape[1])))


def make_gin_layer_kernel(in_pad, d_pad):
    """One grid step == one GIN layer: (A+I)@x -> MLP -> ReLU -> BN -> pool."""

    def kernel(adj_ref, x0_ref, pool_ref, w1_ref, w2_ref, vec_ref,
               xout_ref, pout_ref, x_scr):
        l = pl.program_id(0)

        # Seed the node-feature carry with the (zero-padded) input features.
        @pl.when(l == 0)
        def _():
            x_scr[...] = x0_ref[...]

        x = x_scr[...]

        # GINConv aggregation with the self term folded in: (A + (1+eps)I) @ x.
        h = jnp.dot(adj_ref[...], x, preferred_element_type=jnp.float32)

        # Packed per-layer vectors: sublane 0..3 = b1, b2, gamma, beta.
        vecs = vec_ref[0]                  # (8, d_pad)
        b1 = vecs[0:1, :]
        b2 = vecs[1:2, :]
        gamma = vecs[2:3, :]
        beta = vecs[3:4, :]

        # GINConv MLP: Linear -> ReLU -> Linear, then the encoder's F.relu.
        h = jnp.dot(h, w1_ref[0], preferred_element_type=jnp.float32) + b1
        h = jnp.maximum(h, 0.0)
        h = jnp.dot(h, w2_ref[0], preferred_element_type=jnp.float32) + b2
        h = jnp.maximum(h, 0.0)

        # BatchNorm1d (training-mode batch stats, biased var) folded to 1 FMA.
        mean = jnp.mean(h, axis=0, keepdims=True)
        var = jnp.mean((h - mean) ** 2, axis=0, keepdims=True)
        scale = gamma * jax.lax.rsqrt(var + BN_EPS)
        shift = beta - mean * scale
        h = h * scale + shift

        # Lane-dense per-layer stores; padded columns of h are exactly zero
        # (zero-padded W/b/gamma/beta keep them zero through the whole stack).
        xout_ref[0] = h
        pout_ref[0] = jnp.dot(pool_ref[...].astype(jnp.float32), h,
                              preferred_element_type=jnp.float32)

        # Carry to the next layer.  If in_pad > d_pad the stale trailing
        # columns only ever multiply zero-padded rows of the next W1.
        if in_pad == d_pad:
            x_scr[...] = h
        else:
            x_scr[:, 0:d_pad] = h

    return kernel


def init_gin_encoder_params(key, num_features, embedding_dim, num_gc_layers):
    dim = int(embedding_dim / num_gc_layers)
    params = []
    for i in range(num_gc_layers):
        in_dim = num_features if i == 0 else dim
        key, k1, k2, k3, k4 = jax.random.split(key, 5)
        w1 = jax.random.normal(k1, (in_dim, dim), jnp.float32) * 0.2
        b1 = jax.random.normal(k2, (1, dim), jnp.float32) * 0.1
        w2 = jax.random.normal(k3, (dim, dim), jnp.float32) * 0.2
        b2 = jax.random.normal(k4, (1, dim), jnp.float32) * 0.1
        gamma = jnp.ones((1, dim), jnp.float32)    # BatchNorm1d weight init
        beta = jnp.zeros((1, dim), jnp.float32)    # BatchNorm1d bias init
        params.append((w1, b1, w2, b2, gamma, beta))
    return params


def _vmem_limit_bytes(n, in_pad, d_pad, g_pad):
    """Derive the scoped-VMEM limit from the actual resident working set."""
    f32 = 4
    resident = (n * n * f32            # adj (fetched once, resident)
                + n * in_pad * f32     # x0
                + n * in_pad * f32     # x carry scratch
                + g_pad * n * 2)       # pool (bf16)
    per_layer = ((in_pad * d_pad + d_pad * d_pad + SUBLANE * d_pad) * f32
                 + (n * d_pad + g_pad * d_pad) * f32)
    needed = resident + 2 * per_layer  # streamed blocks are double-buffered
    try:
        cap = int(pltpu.get_tpu_info().vmem_capacity_bytes)
    except Exception:
        cap = 64 * 1024 * 1024         # conservative (v7x per-TC)
    return int(min(0.9 * cap, max(2 * needed, 16 * 1024 * 1024)))


def gin_encoder_forward(node_features, edge_index, graph_index, params,
                        num_graphs):
    N, F = node_features.shape
    L = len(params)
    dim = params[0][2].shape[1]                       # w2 is (dim, dim)
    f_pad = _round_up(F, LANE)
    d_pad = _round_up(dim, LANE)
    in_pad = max(f_pad, d_pad)
    g_pad = _round_up(num_graphs, SUBLANE)

    src, dst = edge_index[0], edge_index[1]
    # A' = A + (1 + eps) * I with eps = 0 (GINConv default). f32, no copy.
    adj = jnp.zeros((N, N), jnp.float32).at[dst, src].add(1.0)
    adj = adj + jnp.eye(N, dtype=jnp.float32)
    # Pool matrix P[g, n] = 1 iff graph_index[n] == g; 0/1 -> exact in bf16.
    pool = (graph_index[None, :] == jnp.arange(g_pad)[:, None]).astype(
        jnp.bfloat16)

    x0 = _pad2d(node_features.astype(jnp.float32), cols=in_pad)

    # Stack per-layer params into 3 streamed arrays (instead of 6*L refs).
    w1s, w2s, vecs = [], [], []
    for (w1, b1, w2, b2, gamma, beta) in params:
        w1s.append(_pad2d(w1, rows=in_pad, cols=d_pad))
        w2s.append(_pad2d(w2, rows=d_pad, cols=d_pad))
        vecs.append(jnp.concatenate([
            _pad2d(b1, cols=d_pad), _pad2d(b2, cols=d_pad),
            _pad2d(gamma, cols=d_pad), _pad2d(beta, cols=d_pad),
            jnp.zeros((SUBLANE - 4, d_pad), jnp.float32)], axis=0))
    w1s = jnp.stack(w1s)     # [L, in_pad, d_pad]
    w2s = jnp.stack(w2s)     # [L, d_pad, d_pad]
    vecs = jnp.stack(vecs)   # [L, 8, d_pad]   (b1, b2, gamma, beta sublanes)

    flops = L * 2 * (N * N * in_pad + N * in_pad * d_pad
                     + N * d_pad * d_pad + g_pad * N * d_pad)
    bytes_accessed = (adj.size * 4 + x0.size * 4 + pool.size * 2
                      + (w1s.size + w2s.size + vecs.size) * 4
                      + L * (N + g_pad) * d_pad * 4)
    cost = pl.CostEstimate(flops=int(flops), transcendentals=int(L * d_pad),
                           bytes_accessed=int(bytes_accessed))

    grid_spec = pltpu.PrefetchScalarGridSpec(
        num_scalar_prefetch=0,
        grid=(L,),
        in_specs=[
            # Constant index maps -> DMA'd once, kept resident across layers.
            pl.BlockSpec((N, N), lambda l: (0, 0)),
            pl.BlockSpec((N, in_pad), lambda l: (0, 0)),
            pl.BlockSpec((g_pad, N), lambda l: (0, 0)),
            # Per-layer streamed (double-buffered) parameter blocks.
            pl.BlockSpec((1, in_pad, d_pad), lambda l: (l, 0, 0)),
            pl.BlockSpec((1, d_pad, d_pad), lambda l: (l, 0, 0)),
            pl.BlockSpec((1, SUBLANE, d_pad), lambda l: (l, 0, 0)),
        ],
        out_specs=(
            pl.BlockSpec((1, N, d_pad), lambda l: (l, 0, 0)),
            pl.BlockSpec((1, g_pad, d_pad), lambda l: (l, 0, 0)),
        ),
        scratch_shapes=[pltpu.VMEM((N, in_pad), jnp.float32)],
    )

    xout, pout = pl.pallas_call(
        make_gin_layer_kernel(in_pad, d_pad),
        out_shape=(jax.ShapeDtypeStruct((L, N, d_pad), jnp.float32),
                   jax.ShapeDtypeStruct((L, g_pad, d_pad), jnp.float32)),
        grid_spec=grid_spec,
        compiler_params=pltpu.CompilerParams(
            dimension_semantics=("arbitrary",),
            vmem_limit_bytes=_vmem_limit_bytes(N, in_pad, d_pad, g_pad)),
        cost_estimate=cost,
    )(adj, x0, pool, w1s, w2s, vecs)

    # Plain-JAX glue: unpad and concatenate per-layer results.
    xs = [xout[i, :, :dim] for i in range(L)]
    xp = [pout[i, :num_graphs, :dim] for i in range(L)]
    return jnp.concatenate(xp, axis=1), jnp.concatenate(xs, axis=1)


def gin_encoder_reference(node_features, edge_index, graph_index, params,
                          num_graphs):
    """Pure-jnp reference reproducing the PyTorch forward semantics."""
    src, dst = edge_index[0], edge_index[1]
    N = node_features.shape[0]
    x = node_features
    xs, xpool = [], []
    for (w1, b1, w2, b2, gamma, beta) in params:
        agg = jnp.zeros((N, x.shape[1]), jnp.float32).at[dst].add(x[src])
        h = x + agg
        h = jnp.maximum(h @ w1 + b1, 0.0)
        h = h @ w2 + b2
        h = jnp.maximum(h, 0.0)
        mean = jnp.mean(h, axis=0, keepdims=True)
        var = jnp.mean((h - mean) ** 2, axis=0, keepdims=True)
        h = (h - mean) / jnp.sqrt(var + BN_EPS) * gamma + beta
        xs.append(h)
        xpool.append(jnp.zeros((num_graphs, h.shape[1]),
                               jnp.float32).at[graph_index].add(h))
        x = h
    return jnp.concatenate(xpool, axis=1), jnp.concatenate(xs, axis=1)


if __name__ == "__main__":
    key = jax.random.PRNGKey(0)

    NUM_NODES = 16
    NUM_FEATURES = 16
    NUM_EDGES = 32
    NUM_GRAPHS = 2
    NUM_GC_LAYERS = 5
    EMBEDDING_DIM = 40  # dim per layer = 40 // 5 = 8

    key, kx, ks, kd = jax.random.split(key, 4)
    node_features = jax.random.normal(kx, (NUM_NODES, NUM_FEATURES),
                                      jnp.float32)
    src = jax.random.randint(ks, (NUM_EDGES,), 0, NUM_NODES)
    dst = jax.random.randint(kd, (NUM_EDGES,), 0, NUM_NODES)
    edge_index = jnp.stack([src, dst], axis=0)  # [2, E]
    graph_index = jnp.concatenate([
        jnp.zeros((NUM_NODES // 2,), jnp.int32),
        jnp.ones((NUM_NODES - NUM_NODES // 2,), jnp.int32),
    ])

    params = init_gin_encoder_params(key, NUM_FEATURES, EMBEDDING_DIM,
                                     NUM_GC_LAYERS)

    emb, inter = gin_encoder_forward(node_features, edge_index, graph_index,
                                     params, NUM_GRAPHS)
    jax.block_until_ready((emb, inter))

    ref_emb, ref_inter = gin_encoder_reference(node_features, edge_index,
                                               graph_index, params, NUM_GRAPHS)
    dim = EMBEDDING_DIM // NUM_GC_LAYERS
    assert emb.shape == (NUM_GRAPHS, dim * NUM_GC_LAYERS)
    assert inter.shape == (NUM_NODES, dim * NUM_GC_LAYERS)
    assert jnp.allclose(emb, ref_emb, atol=1e-4, rtol=1e-4)
    assert jnp.allclose(inter, ref_inter, atol=1e-4, rtol=1e-4)

    print("KERNEL_OK")
</pallas_src>

<mosaic_0001>
module attributes {stable_mosaic.version = 11 : i64} {
  func.func @kernel(%arg0: i32, %arg1: memref<16x16xf32, #tpu.memory_space<vmem>>, %arg2: memref<16x128xf32, #tpu.memory_space<vmem>>, %arg3: memref<8x16xbf16, #tpu.memory_space<vmem>>, %arg4: memref<1x128x128xf32, #tpu.memory_space<vmem>>, %arg5: memref<1x128x128xf32, #tpu.memory_space<vmem>>, %arg6: memref<1x8x128xf32, #tpu.memory_space<vmem>>, %arg7: memref<1x16x128xf32, #tpu.memory_space<vmem>>, %arg8: memref<1x8x128xf32, #tpu.memory_space<vmem>>, %arg9: memref<16x128xf32, #tpu.memory_space<vmem>>) attributes {dimension_semantics = [#tpu.dimension_semantics<arbitrary>], iteration_bounds = array<i64: 5>, scalar_prefetch = 0 : i64, scratch_operands = 1 : i64, tpu.core_type = #tpu.core_type<tc>, window_params = [{pipeline_mode = #tpu.pipeline_mode<synchronous>, transform_indices = @transform_0, window_bounds = array<i64: 16, 16>}, {pipeline_mode = #tpu.pipeline_mode<synchronous>, transform_indices = @transform_1, window_bounds = array<i64: 16, 128>}, {pipeline_mode = #tpu.pipeline_mode<synchronous>, transform_indices = @transform_2, window_bounds = array<i64: 8, 16>}, {transform_indices = @transform_3, window_bounds = array<i64: 1, 128, 128>}, {transform_indices = @transform_4, window_bounds = array<i64: 1, 128, 128>}, {transform_indices = @transform_5, window_bounds = array<i64: 1, 8, 128>}, {transform_indices = @transform_6, window_bounds = array<i64: 1, 16, 128>}, {transform_indices = @transform_7, window_bounds = array<i64: 1, 8, 128>}]} {
    %c0_i32 = arith.constant 0 : i32
    %0 = arith.cmpi eq, %arg0, %c0_i32 : i32
    %1 = arith.extui %0 : i1 to i32
    %c0_i32_0 = arith.constant 0 : i32
    %2 = arith.cmpi ne, %1, %c0_i32_0 : i32
    scf.if %2 {
      %c0_33 = arith.constant 0 : index
      %c0_34 = arith.constant 0 : index
      %57 = vector.load %arg2[%c0_33, %c0_34] : memref<16x128xf32, #tpu.memory_space<vmem>>, vector<16x128xf32>
      %c0_35 = arith.constant 0 : index
      %c0_36 = arith.constant 0 : index
      %58 = vector.load %arg9[%c0_35, %c0_36] : memref<16x128xf32, #tpu.memory_space<vmem>>, vector<16x128xf32>
      tpu.vector_store %arg9[%c0_35, %c0_36], %57 {strides = array<i32>} : memref<16x128xf32, #tpu.memory_space<vmem>>, vector<16x128xf32>,
    } else {
    }
    %c0 = arith.constant 0 : index
    %c0_1 = arith.constant 0 : index
    %3 = vector.load %arg9[%c0, %c0_1] : memref<16x128xf32, #tpu.memory_space<vmem>>, vector<16x128xf32>
    %c0_2 = arith.constant 0 : index
    %c0_3 = arith.constant 0 : index
    %4 = vector.load %arg1[%c0_2, %c0_3] : memref<16x16xf32, #tpu.memory_space<vmem>>, vector<16x16xf32>
    %cst = arith.constant dense<0.000000e+00> : vector<16x128xf32>
    %5 = tpu.matmul %4, %3, %cst {dimension_numbers = #tpu.dot_dimension_numbers<[1], [0], [0], [1], [0, 0, 1, 1], [], []>} : vector<16x16xf32>, vector<16x128xf32>, vector<16x128xf32> -> vector<16x128xf32>
    %c0_4 = arith.constant 0 : index
    %c0_5 = arith.constant 0 : index
    %c0_6 = arith.constant 0 : index
    %6 = vector.load %arg6[%c0_4, %c0_5, %c0_6] : memref<1x8x128xf32, #tpu.memory_space<vmem>>, vector<1x8x128xf32>
    %7 = vector.shape_cast %6 : vector<1x8x128xf32> to vector<8x128xf32>
    %8 = vector.extract_strided_slice %7 {offsets = [0, 0], sizes = [1, 128], strides = [1, 1]} : vector<8x128xf32> to vector<1x128xf32>
    %9 = vector.extract_strided_slice %7 {offsets = [1, 0], sizes = [1, 128], strides = [1, 1]} : vector<8x128xf32> to vector<1x128xf32>
    %10 = vector.extract_strided_slice %7 {offsets = [2, 0], sizes = [1, 128], strides = [1, 1]} : vector<8x128xf32> to vector<1x128xf32>
    %11 = vector.extract_strided_slice %7 {offsets = [3, 0], sizes = [1, 128], strides = [1, 1]} : vector<8x128xf32> to vector<1x128xf32>
    %c0_7 = arith.constant 0 : index
    %c0_8 = arith.constant 0 : index
    %c0_9 = arith.constant 0 : index
    %12 = vector.load %arg4[%c0_7, %c0_8, %c0_9] : memref<1x128x128xf32, #tpu.memory_space<vmem>>, vector<1x128x128xf32>
    %13 = vector.shape_cast %12 : vector<1x128x128xf32> to vector<128x128xf32>
    %cst_10 = arith.constant dense<0.000000e+00> : vector<16x128xf32>
    %14 = tpu.matmul %5, %13, %cst_10 {dimension_numbers = #tpu.dot_dimension_numbers<[1], [0], [0], [1], [0, 0, 1, 1], [], []>} : vector<16x128xf32>, vector<128x128xf32>, vector<16x128xf32> -> vector<16x128xf32>
    %15 = vector.broadcast %8 : vector<1x128xf32> to vector<16x128xf32>
    %16 = arith.addf %14, %15 : vector<16x128xf32>
    %cst_11 = arith.constant 0.000000e+00 : f32
    %17 = vector.broadcast %cst_11 : f32 to vector<16x128xf32>
    %18 = arith.maximumf %16, %17 : vector<16x128xf32>
    %c0_12 = arith.constant 0 : index
    %c0_13 = arith.constant 0 : index
    %c0_14 = arith.constant 0 : index
    %19 = vector.load %arg5[%c0_12, %c0_13, %c0_14] : memref<1x128x128xf32, #tpu.memory_space<vmem>>, vector<1x128x128xf32>
    %20 = vector.shape_cast %19 : vector<1x128x128xf32> to vector<128x128xf32>
    %cst_15 = arith.constant dense<0.000000e+00> : vector<16x128xf32>
    %21 = tpu.matmul %18, %20, %cst_15 {dimension_numbers = #tpu.dot_dimension_numbers<[1], [0], [0], [1], [0, 0, 1, 1], [], []>} : vector<16x128xf32>, vector<128x128xf32>, vector<16x128xf32> -> vector<16x128xf32>
    %22 = vector.broadcast %9 : vector<1x128xf32> to vector<16x128xf32>
    %23 = arith.addf %21, %22 : vector<16x128xf32>
    %cst_16 = arith.constant 0.000000e+00 : f32
    %24 = vector.broadcast %cst_16 : f32 to vector<16x128xf32>
    %25 = arith.maximumf %23, %24 : vector<16x128xf32>
    %cst_17 = arith.constant dense<0.000000e+00> : vector<128xf32>
    %26 = vector.multi_reduction <add>, %25, %cst_17 [0] : vector<16x128xf32> to vector<128xf32>
    %27 = vector.shape_cast %26 : vector<128xf32> to vector<1x128xf32>
    %cst_18 = arith.constant 1.600000e+01 : f32
    %28 = vector.broadcast %cst_18 : f32 to vector<1x128xf32>
    %29 = arith.divf %27, %28 : vector<1x128xf32>
    %30 = vector.broadcast %29 : vector<1x128xf32> to vector<16x128xf32>
    %31 = arith.subf %25, %30 : vector<16x128xf32>
    %32 = arith.mulf %31, %31 : vector<16x128xf32>
    %cst_19 = arith.constant dense<0.000000e+00> : vector<128xf32>
    %33 = vector.multi_reduction <add>, %32, %cst_19 [0] : vector<16x128xf32> to vector<128xf32>
    %34 = vector.shape_cast %33 : vector<128xf32> to vector<1x128xf32>
    %cst_20 = arith.constant 1.600000e+01 : f32
    %35 = vector.broadcast %cst_20 : f32 to vector<1x128xf32>
    %36 = arith.divf %34, %35 : vector<1x128xf32>
    %cst_21 = arith.constant 9.99999974E-6 : f32
    %37 = vector.broadcast %cst_21 : f32 to vector<1x128xf32>
    %38 = arith.addf %36, %37 : vector<1x128xf32>
    %39 = math.rsqrt %38 : vector<1x128xf32>
    %40 = arith.mulf %10, %39 : vector<1x128xf32>
    %41 = arith.mulf %29, %40 : vector<1x128xf32>
    %42 = arith.subf %11, %41 : vector<1x128xf32>
    %43 = vector.broadcast %40 : vector<1x128xf32> to vector<16x128xf32>
    %44 = arith.mulf %25, %43 : vector<16x128xf32>
    %45 = vector.broadcast %42 : vector<1x128xf32> to vector<16x128xf32>
    %46 = arith.addf %44, %45 : vector<16x128xf32>
    %c0_22 = arith.constant 0 : index
    %c0_23 = arith.constant 0 : index
    %c0_24 = arith.constant 0 : index
    %47 = vector.load %arg7[%c0_22, %c0_23, %c0_24] : memref<1x16x128xf32, #tpu.memory_space<vmem>>, vector<1x16x128xf32>
    %48 = vector.shape_cast %47 : vector<1x16x128xf32> to vector<16x128xf32>
    %49 = vector.shape_cast %46 : vector<16x128xf32> to vector<1x16x128xf32>
    tpu.vector_store %arg7[%c0_22, %c0_23, %c0_24], %49 {strides = array<i32>} : memref<1x16x128xf32, #tpu.memory_space<vmem>>, vector<1x16x128xf32>,
    %c0_25 = arith.constant 0 : index
    %c0_26 = arith.constant 0 : index
    %50 = vector.load %arg3[%c0_25, %c0_26] : memref<8x16xbf16, #tpu.memory_space<vmem>>, vector<8x16xbf16>
    %51 = arith.extf %50 : vector<8x16xbf16> to vector<8x16xf32>
    %cst_27 = arith.constant dense<0.000000e+00> : vector<8x128xf32>
    %52 = tpu.matmul %51, %46, %cst_27 {dimension_numbers = #tpu.dot_dimension_numbers<[1], [0], [0], [1], [0, 0, 1, 1], [], []>} : vector<8x16xf32>, vector<16x128xf32>, vector<8x128xf32> -> vector<8x128xf32>
    %c0_28 = arith.constant 0 : index
    %c0_29 = arith.constant 0 : index
    %c0_30 = arith.constant 0 : index
    %53 = vector.load %arg8[%c0_28, %c0_29, %c0_30] : memref<1x8x128xf32, #tpu.memory_space<vmem>>, vector<1x8x128xf32>
    %54 = vector.shape_cast %53 : vector<1x8x128xf32> to vector<8x128xf32>
    %55 = vector.shape_cast %52 : vector<8x128xf32> to vector<1x8x128xf32>
    tpu.vector_store %arg8[%c0_28, %c0_29, %c0_30], %55 {strides = array<i32>} : memref<1x8x128xf32, #tpu.memory_space<vmem>>, vector<1x8x128xf32>,
    %c0_31 = arith.constant 0 : index
    %c0_32 = arith.constant 0 : index
    %56 = vector.load %arg9[%c0_31, %c0_32] : memref<16x128xf32, #tpu.memory_space<vmem>>, vector<16x128xf32>
    tpu.vector_store %arg9[%c0_31, %c0_32], %46 {strides = array<i32>} : memref<16x128xf32, #tpu.memory_space<vmem>>, vector<16x128xf32>,
    return
  }
  func.func @transform_0(%arg0: i32) -> (i32, i32) {
    %c0_i32 = arith.constant 0 : i32
    %c0_i32_0 = arith.constant 0 : i32
    %c0_i32_1 = arith.constant 0 : i32
    return %c0_i32, %c0_i32_0 : i32, i32
  }
  func.func @transform_1(%arg0: i32) -> (i32, i32) {
    %c0_i32 = arith.constant 0 : i32
    %c0_i32_0 = arith.constant 0 : i32
    %c0_i32_1 = arith.constant 0 : i32
    return %c0_i32, %c0_i32_0 : i32, i32
  }
  func.func @transform_2(%arg0: i32) -> (i32, i32) {
    %c0_i32 = arith.constant 0 : i32
    %c0_i32_0 = arith.constant 0 : i32
    %c0_i32_1 = arith.constant 0 : i32
    return %c0_i32, %c0_i32_0 : i32, i32
  }
  func.func @transform_3(%arg0: i32) -> (i32, i32, i32) {
    %c0_i32 = arith.constant 0 : i32
    %c0_i32_0 = arith.constant 0 : i32
    %c0_i32_1 = arith.constant 0 : i32
    return %arg0, %c0_i32, %c0_i32_0 : i32, i32, i32
  }
  func.func @transform_4(%arg0: i32) -> (i32, i32, i32) {
    %c0_i32 = arith.constant 0 : i32
    %c0_i32_0 = arith.constant 0 : i32
    %c0_i32_1 = arith.constant 0 : i32
    return %arg0, %c0_i32, %c0_i32_0 : i32, i32, i32
  }
  func.func @transform_5(%arg0: i32) -> (i32, i32, i32) {
    %c0_i32 = arith.constant 0 : i32
    %c0_i32_0 = arith.constant 0 : i32
    %c0_i32_1 = arith.constant 0 : i32
    return %arg0, %c0_i32, %c0_i32_0 : i32, i32, i32
  }
  func.func @transform_6(%arg0: i32) -> (i32, i32, i32) {
    %c0_i32 = arith.constant 0 : i32
    %c0_i32_0 = arith.constant 0 : i32
    %c0_i32_1 = arith.constant 0 : i32
    return %arg0, %c0_i32, %c0_i32_0 : i32, i32, i32
  }
  func.func @transform_7(%arg0: i32) -> (i32, i32, i32) {
    %c0_i32 = arith.constant 0 : i32
    %c0_i32_0 = arith.constant 0 : i32
    %c0_i32_1 = arith.constant 0 : i32
    return %arg0, %c0_i32, %c0_i32_0 : i32, i32, i32
  }
}

</mosaic_0001>

<llo_original>
// kernel: tpu_custom_call.1
$region0: #{tpu_custom_call.1}
  #allocation0 [shape = 'u32[]', space=smem, size = 0x4, offset = 0x4, fixed_abs, tag = 'smem constant byte address 0x4 - core index']
  #allocation1 [shape = 'u32[144,128]{1,0:T(1,128)}', space=vmem, size = 0x12000, scoped, tag = 'internal scratch']
  #allocation2 [shape = 'f32[16,128]{1,0:T(8,128)}', space=vmem, size = 0x2000, scoped, tag = 'scratch operand']
  %s0 = inlined_call_operand.hbm [shape: f32[16,16], index: 0, kind: input, shape index: {}]
  %s1 = inlined_call_operand.hbm [shape: f32[16,128], index: 1, kind: input, shape index: {}]
  %s2 = inlined_call_operand.vmem [shape: bf16[8,16], index: 2, kind: input, shape index: {}]
  %s3 = inlined_call_operand.hbm [shape: f32[5,128,128], index: 3, kind: input, shape index: {}]
  %s4 = inlined_call_operand.hbm [shape: f32[5,128,128], index: 4, kind: input, shape index: {}]
  %s5 = inlined_call_operand.hbm [shape: f32[5,8,128], index: 5, kind: input, shape index: {}]
  %s6 = inlined_call_operand.hbm [shape: f32[5,16,128], index: 6, kind: output, shape index: {0}]
  %s7 = inlined_call_operand.hbm [shape: f32[5,8,128], index: 7, kind: output, shape index: {1}]
  %8 = xla_tuple %s6, %s7
  %s9 = sld [smem:[#allocation0]]
  $region89: #{tpu_custom_call.1} parent=0
    _
  %s11 = ssub.s32 1, %s9
  %s12 = scalar_select 0, %s11, %s9
  $region1: #{tpu_custom_call.1} parent=0
    #allocation3 [shape = 'u8[8192]{0}', space=vmem, size = 0x2000, scoped, tag = 'input window, operand 0, single buffered']
    #allocation4 [shape = 's32[2]{0}', space=sflag, size = 0x8, scoped, tag = 'scoped memory for tpu_custom_call.1']
    #allocation5 [shape = 's32[2]{0}', space=sflag, size = 0x8, scoped, tag = 'scoped memory for tpu_custom_call.1']
    #allocation6 [shape = 'u8[8192]{0}', space=vmem, size = 0x2000, scoped, tag = 'input window, operand 1, single buffered']
    #allocation7 [shape = 's32[1]{0}', space=sflag, size = 0x4, scoped, tag = 'scoped memory for tpu_custom_call.1']
    #allocation8 [shape = 'u8[131072]{0}', space=vmem, size = 0x20000, scoped, tag = 'input window, operand 3']
    #allocation9 [shape = 'u8[131072]{0}', space=vmem, size = 0x20000, scoped, tag = 'input window, operand 4']
    #allocation10 [shape = 'u8[8192]{0}', space=vmem, size = 0x2000, scoped, tag = 'input window, operand 5']
    #allocation11 [shape = 'u8[16384]{0}', space=vmem, size = 0x4000, scoped, tag = 'output window, operand 0']
    #allocation12 [shape = 'u8[8192]{0}', space=vmem, size = 0x2000, scoped, tag = 'output window, operand 1']
    #allocation13 [shape = 's32[2]{0}', space=sflag, size = 0x8, scoped, tag = 'scoped memory for tpu_custom_call.1']
    %13 = vsyncpa [#allocation4], 0
    %14 = vsyncpa [#allocation7], 0
    %15 = vsyncpa [#allocation5], 0
    %s16 = scalar_lea.sflag [#allocation5], 1
    %17 = vsyncpa %s16, 0
    %18 = vsyncpa [#allocation13], 0
    %s19 = scalar_lea.sflag [#allocation13], 1
    %20 = vsyncpa %s19, 0
    loop: start=0, step=1, limit=7
    $region2: #{tpu_custom_call.1} parent=1 // loop_pre_header
      _
    $region3: #{tpu_custom_call.1} parent=1 // loop_header
      %s22 = sphi 0, %s26
      %p23 = scmp.ge.s32.totalorder %s22, 7
      %s30 = sphi 0, %s30
      %s32 = sphi 0, %s30
      %s33 = sphi 0, %s32
      %s47 = sphi 0, %s33
      %s51 = sphi 0, %s51
      %s53 = sphi 0, %s51
      %s54 = sphi 0, %s53
      %s68 = sphi 0, %s54
      %s72 = sphi 0, %s72
      %s74 = sphi 0, %s72
      %s75 = sphi 0, %s74
      %s89 = sphi 0, %s75
      %s95 = sphi 0, %s97
      %s98 = sphi 0, %s95
      %s99 = sphi 0, %s98
      %s115 = sphi 0, %s99
      %s121 = sphi 0, %s123
      %s124 = sphi 0, %s121
      %s125 = sphi 0, %s124
      %s141 = sphi 0, %s125
      %s147 = sphi 0, %s149
      %s150 = sphi 0, %s147
      %s151 = sphi 0, %s150
      %s167 = sphi 0, %s151
      %s173 = sphi 0, %s175
      %s176 = sphi 0, %s173
      %s177 = sphi 0, %s176
      %s193 = sphi 0, %s177
      %s199 = sphi 0, %s201
      %s202 = sphi 0, %s199
      %s203 = sphi 0, %s202
      %s219 = sphi 0, %s203
    $region4: #{tpu_custom_call.1} parent=1 // loop_header_branch
      %25 = sbr.rel (%p23) target = $region8
    $region5: #{tpu_custom_call.1} parent=1 // loop_body
      %s27 = ssub.s32 %s22, 1
      %s28 = ssub.s32 %s22, 2
      %s29 = sadd.s32 %s22, 1
      %s31 = sadd.s32 %s30, 1
      %p34 = scmp.eq.s32.totalorder %s22, 4
      %p35 = scmp.ne.s32.totalorder %s30, %s32
      %p36 = scmp.eq.s32.totalorder %s22, 0
      %p37 = por %p35, %p36
      %p38 = scmp.ne.s32.totalorder %s30, %s32
      %p39 = scmp.eq.s32.totalorder %s27, 4
      %p40 = por %p38, %p39
      %p41 = scmp.ne.s32.totalorder %s32, %s33
      %p42 = scmp.eq.s32.totalorder %s27, 0
      %p43 = por %p41, %p42
      %p44 = scmp.ne.s32.totalorder %s32, %s33
      %p45 = scmp.eq.s32.totalorder %s28, 4
      %p46 = por %p44, %p45
      %p48 = scmp.ne.s32.totalorder %s33, %s47
      %p49 = scmp.eq.s32.totalorder %s28, 0
      %p50 = por %p48, %p49
      %s52 = sadd.s32 %s51, 1
      %p55 = scmp.eq.s32.totalorder %s22, 4
      %p56 = scmp.ne.s32.totalorder %s51, %s53
      %p57 = scmp.eq.s32.totalorder %s22, 0
      %p58 = por %p56, %p57
      %p59 = scmp.ne.s32.totalorder %s51, %s53
      %p60 = scmp.eq.s32.totalorder %s27, 4
      %p61 = por %p59, %p60
      %p62 = scmp.ne.s32.totalorder %s53, %s54
      %p63 = scmp.eq.s32.totalorder %s27, 0
      %p64 = por %p62, %p63
      %p65 = scmp.ne.s32.totalorder %s53, %s54
      %p66 = scmp.eq.s32.totalorder %s28, 4
      %p67 = por %p65, %p66
      %p69 = scmp.ne.s32.totalorder %s54, %s68
      %p70 = scmp.eq.s32.totalorder %s28, 0
      %p71 = por %p69, %p70
      %s73 = sadd.s32 %s72, 1
      %p76 = scmp.eq.s32.totalorder %s22, 4
      %p77 = scmp.ne.s32.totalorder %s72, %s74
      %p78 = scmp.eq.s32.totalorder %s22, 0
      %p79 = por %p77, %p78
      %p80 = scmp.ne.s32.totalorder %s72, %s74
      %p81 = scmp.eq.s32.totalorder %s27, 4
      %p82 = por %p80, %p81
      %p83 = scmp.ne.s32.totalorder %s74, %s75
      %p84 = scmp.eq.s32.totalorder %s27, 0
      %p85 = por %p83, %p84
      %p86 = scmp.ne.s32.totalorder %s74, %s75
      %p87 = scmp.eq.s32.totalorder %s28, 4
      %p88 = por %p86, %p87
      %p90 = scmp.ne.s32.totalorder %s75, %s89
      %p91 = scmp.eq.s32.totalorder %s28, 0
      %p92 = por %p90, %p91
      %s93 = ssub.s32 %s22, %s29
      %p94 = scmp.eq.s32.totalorder %s93, 0
      %s96 = sadd.s32 %s95, 1
      %s97 = scalar_select %p94, %s95, %s96
      %p100 = pneg %p94
      %p101 = scmp.eq.s32.totalorder %s22, 4
      %p102 = por %p100, %p101
      %p103 = scmp.ne.s32.totalorder %s95, %s98
      %p104 = scmp.eq.s32.totalorder %s22, 0
      %p105 = por %p103, %p104
      %p106 = scmp.ne.s32.totalorder %s95, %s98
      %p107 = scmp.eq.s32.totalorder %s27, 4
      %p108 = por %p106, %p107
      %p109 = scmp.ne.s32.totalorder %s98, %s99
      %p110 = scmp.eq.s32.totalorder %s27, 0
      %p111 = por %p109, %p110
      %p112 = scmp.ne.s32.totalorder %s98, %s99
      %p113 = scmp.eq.s32.totalorder %s28, 4
      %p114 = por %p112, %p113
      %p116 = scmp.ne.s32.totalorder %s99, %s115
      %p117 = scmp.eq.s32.totalorder %s28, 0
      %p118 = por %p116, %p117
      %s119 = ssub.s32 %s22, %s29
      %p120 = scmp.eq.s32.totalorder %s119, 0
      %s122 = sadd.s32 %s121, 1
      %s123 = scalar_select %p120, %s121, %s122
      %p126 = pneg %p120
      %p127 = scmp.eq.s32.totalorder %s22, 4
      %p128 = por %p126, %p127
      %p129 = scmp.ne.s32.totalorder %s121, %s124
      %p130 = scmp.eq.s32.totalorder %s22, 0
      %p131 = por %p129, %p130
      %p132 = scmp.ne.s32.totalorder %s121, %s124
      %p133 = scmp.eq.s32.totalorder %s27, 4
      %p134 = por %p132, %p133
      %p135 = scmp.ne.s32.totalorder %s124, %s125
      %p136 = scmp.eq.s32.totalorder %s27, 0
      %p137 = por %p135, %p136
      %p138 = scmp.ne.s32.totalorder %s124, %s125
      %p139 = scmp.eq.s32.totalorder %s28, 4
      %p140 = por %p138, %p139
      %p142 = scmp.ne.s32.totalorder %s125, %s141
      %p143 = scmp.eq.s32.totalorder %s28, 0
      %p144 = por %p142, %p143
      %s145 = ssub.s32 %s22, %s29
      %p146 = scmp.eq.s32.totalorder %s145, 0
      %s148 = sadd.s32 %s147, 1
      %s149 = scalar_select %p146, %s147, %s148
      %p152 = pneg %p146
      %p153 = scmp.eq.s32.totalorder %s22, 4
      %p154 = por %p152, %p153
      %p155 = scmp.ne.s32.totalorder %s147, %s150
      %p156 = scmp.eq.s32.totalorder %s22, 0
      %p157 = por %p155, %p156
      %p158 = scmp.ne.s32.totalorder %s147, %s150
      %p159 = scmp.eq.s32.totalorder %s27, 4
      %p160 = por %p158, %p159
      %p161 = scmp.ne.s32.totalorder %s150, %s151
      %p162 = scmp.eq.s32.totalorder %s27, 0
      %p163 = por %p161, %p162
      %p164 = scmp.ne.s32.totalorder %s150, %s151
      %p165 = scmp.eq.s32.totalorder %s28, 4
      %p166 = por %p164, %p165
      %p168 = scmp.ne.s32.totalorder %s151, %s167
      %p169 = scmp.eq.s32.totalorder %s28, 0
      %p170 = por %p168, %p169
      %s171 = ssub.s32 %s22, %s29
      %p172 = scmp.eq.s32.totalorder %s171, 0
      %s174 = sadd.s32 %s173, 1
      %s175 = scalar_select %p172, %s173, %s174
      %p178 = pneg %p172
      %p179 = scmp.eq.s32.totalorder %s22, 4
      %p180 = por %p178, %p179
      %p181 = scmp.ne.s32.totalorder %s173, %s176
      %p182 = scmp.eq.s32.totalorder %s22, 0
      %p183 = por %p181, %p182
      %p184 = scmp.ne.s32.totalorder %s173, %s176
      %p185 = scmp.eq.s32.totalorder %s27, 4
      %p186 = por %p184, %p185
      %p187 = scmp.ne.s32.totalorder %s176, %s177
      %p188 = scmp.eq.s32.totalorder %s27, 0
      %p189 = por %p187, %p188
      %p190 = scmp.ne.s32.totalorder %s176, %s177
      %p191 = scmp.eq.s32.totalorder %s28, 4
      %p192 = por %p190, %p191
      %p194 = scmp.ne.s32.totalorder %s177, %s193
      %p195 = scmp.eq.s32.totalorder %s28, 0
      %p196 = por %p194, %p195
      %s197 = ssub.s32 %s22, %s29
      %p198 = scmp.eq.s32.totalorder %s197, 0
      %s200 = sadd.s32 %s199, 1
      %s201 = scalar_select %p198, %s199, %s200
      %p204 = pneg %p198
      %p205 = scmp.eq.s32.totalorder %s22, 4
      %p206 = por %p204, %p205
      %p207 = scmp.ne.s32.totalorder %s199, %s202
      %p208 = scmp.eq.s32.totalorder %s22, 0
      %p209 = por %p207, %p208
      %p210 = scmp.ne.s32.totalorder %s199, %s202
      %p211 = scmp.eq.s32.totalorder %s27, 4
      %p212 = por %p210, %p211
      %p213 = scmp.ne.s32.totalorder %s202, %s203
      %p214 = scmp.eq.s32.totalorder %s27, 0
      %p215 = por %p213, %p214
      %p216 = scmp.ne.s32.totalorder %s202, %s203
      %p217 = scmp.eq.s32.totalorder %s28, 4
      %p218 = por %p216, %p217
      %p220 = scmp.ne.s32.totalorder %s203, %s219
      %p221 = scmp.eq.s32.totalorder %s28, 0
      %p222 = por %p220, %p221
      %p223 = scmp.le.s32.totalorder 1, %s22
      %p224 = scmp.lt.s32.totalorder %s22, 6
      %p225 = pnand %p223, %p224
      %p226 = pneg %p225
      // Predicated region
      $region9: #{tpu_custom_call.1} parent=5 // pred_check
        _
      $region10: #{tpu_custom_call.1} parent=5 // pred_check_branch
        %228 = sbr.rel (%p225) target = $region12
      $region11: #{tpu_custom_call.1} parent=5 // pred_region
        %s229 = ssub.s32 %s22, 1
        // Predicated region
        $region13: #{tpu_custom_call.1} parent=11 // pred_check
          %p230 = pneg %p43
        $region14: #{tpu_custom_call.1} parent=11 // pred_check_branch
          %232 = sbr.rel (%p230) target = $region16
        $region15: #{tpu_custom_call.1} parent=11 // pred_region
          %s234 = ssub.s32 256, 256
          %235 = vsyncadd [#allocation4], %s234
          %s236 = sshll.u32 [#allocation3], 4
          %s237 = int_to_ptr.vmem [resolvable:$true] %s236
          %242 = dma.hbm_to_vmem [thread:$0]  %s0, 256, %s237, [#allocation4], 128, 128, 8
        $region16: #{tpu_custom_call.1} parent=11 // pred_fallthru
          _
        // Predicated region
        $region17: #{tpu_custom_call.1} parent=11 // pred_check
          %p243 = pneg %p64
        $region18: #{tpu_custom_call.1} parent=11 // pred_check_branch
          %245 = sbr.rel (%p243) target = $region20
        $region19: #{tpu_custom_call.1} parent=11 // pred_region
          %s247 = ssub.s32 256, 256
          %248 = vsyncadd [#allocation7], %s247
          %s249 = sshll.u32 [#allocation6], 4
          %s250 = int_to_ptr.vmem [resolvable:$true] %s249
          %255 = dma.hbm_to_vmem [thread:$0]  %s1, 256, %s250, [#allocation7], 128, 128, 8
        $region20: #{tpu_custom_call.1} parent=11 // pred_fallthru
          _
        // Predicated region
        $region21: #{tpu_custom_call.1} parent=11 // pred_check
          %p256 = pneg %p85
        $region22: #{tpu_custom_call.1} parent=11 // pred_check_branch
          %258 = sbr.rel (%p256) target = $region24
        $region23: #{tpu_custom_call.1} parent=11 // pred_region
          _
        $region24: #{tpu_custom_call.1} parent=11 // pred_fallthru
          _
      $region12: #{tpu_custom_call.1} parent=5 // pred_fallthru
        _
      %p259 = scmp.lt.s32.totalorder %s22, 5
      // Predicated region
      $region25: #{tpu_custom_call.1} parent=5 // pred_check
        %p260 = pneg %p259
      $region26: #{tpu_custom_call.1} parent=5 // pred_check_branch
        %262 = sbr.rel (%p260) target = $region28
      $region27: #{tpu_custom_call.1} parent=5 // pred_region
        // Predicated region
        $region29: #{tpu_custom_call.1} parent=27 // pred_check
          %p263 = pneg %p105
        $region30: #{tpu_custom_call.1} parent=27 // pred_check_branch
          %265 = sbr.rel (%p263) target = $region32
        $region31: #{tpu_custom_call.1} parent=27 // pred_region
          %s266 = sand.u32 %s22, 1
          %s267 = scalar_lea.sflag [#allocation4], %s266
          %s268 = sand.u32 %s95, 1
          %s269 = smul.addr %s268, 128
          %s270 = scalar_lea.vmem [#allocation8], %s269
          %s272 = ssub.s32 2048, 2048
          %273 = vsyncadd %s267, %s272
          %s274 = smul.addr %s22, 16
          %s275 = smul.addr %s274, 128
          %s276 = scalar_lea.hbm %s3, %s275
          %s277 = sshll.u32 %s270, 4
          %s278 = int_to_ptr.vmem [resolvable:$true] %s277
          %283 = dma.hbm_to_vmem [thread:$0]  %s276, 2048, %s278, %s267, 128, 128, 8
        $region32: #{tpu_custom_call.1} parent=27 // pred_fallthru
          _
        // Predicated region
        $region33: #{tpu_custom_call.1} parent=27 // pred_check
          %p284 = pneg %p131
        $region34: #{tpu_custom_call.1} parent=27 // pred_check_branch
          %286 = sbr.rel (%p284) target = $region36
        $region35: #{tpu_custom_call.1} parent=27 // pred_region
          %s287 = sand.u32 %s22, 1
          %s288 = scalar_lea.sflag [#allocation4], %s287
          %s289 = sand.u32 %s121, 1
          %s290 = smul.addr %s289, 128
          %s291 = scalar_lea.vmem [#allocation9], %s290
          %s293 = ssub.s32 2048, 2048
          %294 = vsyncadd %s288, %s293
          %s295 = smul.addr %s22, 16
          %s296 = smul.addr %s295, 128
          %s297 = scalar_lea.hbm %s4, %s296
          %s298 = sshll.u32 %s291, 4
          %s299 = int_to_ptr.vmem [resolvable:$true] %s298
          %304 = dma.hbm_to_vmem [thread:$0]  %s297, 2048, %s299, %s288, 128, 128, 8
        $region36: #{tpu_custom_call.1} parent=27 // pred_fallthru
          _
        // Predicated region
        $region37: #{tpu_custom_call.1} parent=27 // pred_check
          %p305 = pneg %p157
        $region38: #{tpu_custom_call.1} parent=27 // pred_check_branch
          %307 = sbr.rel (%p305) target = $region40
        $region39: #{tpu_custom_call.1} parent=27 // pred_region
          %s308 = sand.u32 %s22, 1
          %s309 = scalar_lea.sflag [#allocation4], %s308
          %s310 = sand.u32 %s147, 1
          %s311 = smul.addr %s310, 8
          %s312 = scalar_lea.vmem [#allocation10], %s311
          %s314 = ssub.s32 128, 128
          %315 = vsyncadd %s309, %s314
          %s316 = smul.addr %s22, 128
          %s317 = scalar_lea.hbm %s5, %s316
          %s319 = sshll.u32 %s312, 4
          %s320 = int_to_ptr.vmem [resolvable:$true] %s319
          %322 = dma.hbm_to_vmem [thread:$0]  %s317, 128, %s320, %s309
        $region40: #{tpu_custom_call.1} parent=27 // pred_fallthru
          _
      $region28: #{tpu_custom_call.1} parent=5 // pred_fallthru
        _
      %p323 = scmp.le.s32.totalorder 1, %s22
      %p324 = scmp.lt.s32.totalorder %s22, 6
      %p325 = pnand %p323, %p324
      %p326 = pneg %p325
      // Predicated region
      $region41: #{tpu_custom_call.1} parent=5 // pred_check
        _
      $region42: #{tpu_custom_call.1} parent=5 // pred_check_branch
        %328 = sbr.rel (%p325) target = $region44
      $region43: #{tpu_custom_call.1} parent=5 // pred_region
        %s329 = ssub.s32 %s22, 1
        // Predicated region
        $region45: #{tpu_custom_call.1} parent=43 // pred_check
          %p330 = pneg %p43
        $region46: #{tpu_custom_call.1} parent=43 // pred_check_branch
          %332 = sbr.rel (%p330) target = $region48
        $region47: #{tpu_custom_call.1} parent=43 // pred_region
          %333 = dma.done [#allocation4], 256
        $region48: #{tpu_custom_call.1} parent=43 // pred_fallthru
          _
        // Predicated region
        $region49: #{tpu_custom_call.1} parent=43 // pred_check
          %p334 = pneg %p64
        $region50: #{tpu_custom_call.1} parent=43 // pred_check_branch
          %336 = sbr.rel (%p334) target = $region52
        $region51: #{tpu_custom_call.1} parent=43 // pred_region
          %337 = dma.done [#allocation7], 256
        $region52: #{tpu_custom_call.1} parent=43 // pred_fallthru
          _
        %s338 = sand.u32 %s27, 1
        %s339 = scalar_lea.sflag [#allocation4], %s338
        %s340 = sand.u32 %s98, 1
        %s341 = smul.addr %s340, 128
        %s342 = scalar_lea.vmem [#allocation8], %s341
        // Predicated region
        $region53: #{tpu_custom_call.1} parent=43 // pred_check
          %p343 = pneg %p111
        $region54: #{tpu_custom_call.1} parent=43 // pred_check_branch
          %345 = sbr.rel (%p343) target = $region56
        $region55: #{tpu_custom_call.1} parent=43 // pred_region
          %346 = dma.done %s339, 2048
        $region56: #{tpu_custom_call.1} parent=43 // pred_fallthru
          _
        %s347 = sand.u32 %s27, 1
        %s348 = scalar_lea.sflag [#allocation4], %s347
        %s349 = sand.u32 %s124, 1
        %s350 = smul.addr %s349, 128
        %s351 = scalar_lea.vmem [#allocation9], %s350
        // Predicated region
        $region57: #{tpu_custom_call.1} parent=43 // pred_check
          %p352 = pneg %p137
        $region58: #{tpu_custom_call.1} parent=43 // pred_check_branch
          %354 = sbr.rel (%p352) target = $region60
        $region59: #{tpu_custom_call.1} parent=43 // pred_region
          %355 = dma.done %s348, 2048
        $region60: #{tpu_custom_call.1} parent=43 // pred_fallthru
          _
        %s356 = sand.u32 %s27, 1
        %s357 = scalar_lea.sflag [#allocation4], %s356
        %s358 = sand.u32 %s150, 1
        %s359 = smul.addr %s358, 8
        %s360 = scalar_lea.vmem [#allocation10], %s359
        // Predicated region
        $region61: #{tpu_custom_call.1} parent=43 // pred_check
          %p361 = pneg %p163
        $region62: #{tpu_custom_call.1} parent=43 // pred_check_branch
          %363 = sbr.rel (%p361) target = $region64
        $region63: #{tpu_custom_call.1} parent=43 // pred_region
          %364 = dma.done %s357, 128
        $region64: #{tpu_custom_call.1} parent=43 // pred_fallthru
          _
        %p365 = pneg %p43
        %p366 = pneg %p40
        %p367 = pneg %p64
        %p368 = pneg %p61
        %p369 = pneg %p85
        %p370 = pneg %p82
        %s371 = sand.u32 %s27, 1
        %s372 = scalar_lea.sflag [#allocation4], %s371
        %s373 = sand.u32 %s98, 1
        %s374 = smul.addr %s373, 128
        %s375 = scalar_lea.vmem [#allocation8], %s374
        %p376 = pneg %p111
        %p377 = pneg %p108
        %s378 = sand.u32 %s27, 1
        %s379 = scalar_lea.sflag [#allocation4], %s378
        %s380 = sand.u32 %s124, 1
        %s381 = smul.addr %s380, 128
        %s382 = scalar_lea.vmem [#allocation9], %s381
        %p383 = pneg %p137
        %p384 = pneg %p134
        %s385 = sand.u32 %s27, 1
        %s386 = scalar_lea.sflag [#allocation4], %s385
        %s387 = sand.u32 %s150, 1
        %s388 = smul.addr %s387, 8
        %s389 = scalar_lea.vmem [#allocation10], %s388
        %p390 = pneg %p163
        %p391 = pneg %p160
        %p392 = pneg %p189
        %p393 = pneg %p186
        %s394 = sand.u32 %s176, 1
        %s395 = scalar_lea.sflag [#allocation5], %s394
        %s396 = sand.u32 %s176, 1
        %s397 = smul.addr %s396, 16
        %s398 = scalar_lea.vmem [#allocation11], %s397
        %p399 = pneg %p215
        %p400 = pneg %p212
        %s401 = sand.u32 %s202, 1
        %s402 = scalar_lea.sflag [#allocation13], %s401
        %s403 = sand.u32 %s202, 1
        %s404 = smul.addr %s403, 8
        %s405 = scalar_lea.vmem [#allocation12], %s404
        %p406 = scmp.eq.s32.totalorder %s27, 0
        // Predicated region
        $region65: #{tpu_custom_call.1} parent=43 // pred_check
          %p407 = pneg %p406
        $region66: #{tpu_custom_call.1} parent=43 // pred_check_branch
          %409 = sbr.rel (%p407) target = $region68
        $region67: #{tpu_custom_call.1} parent=43 // pred_region
          %v410 = vld [vmem:[#allocation6] sm:$0xff]
          %v411 = vld [vmem:[#allocation6 + $0x8] sm:$0xff]
          %412 = vst [vmem:[#allocation2] sm:$0xff] %v410
          %413 = vst [vmem:[#allocation2 + $0x8] sm:$0xff] %v411
        $region68: #{tpu_custom_call.1} parent=43 // pred_fallthru
          _
        %v414 = vld [vmem:[#allocation2] sm:$0xff]
        %v415 = vld [vmem:[#allocation2 + $0x8] sm:$0xff]
        %v416 = vld [vmem:[#allocation3] sm:$0xff]
        %v417 = vld [vmem:[#allocation3 + $0x8] sm:$0xff]
        %vm418 = vcmask 130048
        %v420 = vsel %vm418, %v416, 0
        %v423 = vsel %vm418, %v417, 0
        %425 = vmatprep.subr.mxu0 0.0
        %426 = vmatpush1.msra.mxu0 %v414
        %427 = vmatprep.subr.mxu0 0.0
        %428 = vmatpush1.msra.mxu0 %v415
        %429 = vmatprep.subr.mxu0 0.0
        %430 = vmatpush1.msra.mxu0 0.0
        %431 = vmatprep.subr.mxu0 0.0
        %432 = vmatpush1.msra.mxu0 0.0
        %433 = vmatprep.subr.mxu0 0.0
        %434 = vmatpush1.msra.mxu0 0.0
        %435 = vmatprep.subr.mxu0 0.0
        %436 = vmatpush1.msra.mxu0 0.0
        %437 = vmatprep.subr.mxu0 0.0
        %438 = vmatpush1.msra.mxu0 0.0
        %439 = vmatprep.subr.mxu0 0.0
        %440 = vmatpush1.msra.mxu0 0.0
        %441 = vmatprep.subr.mxu0 0.0
        %442 = vmatpush1.msra.mxu0 0.0
        %443 = vmatprep.subr.mxu0 0.0
        %444 = vmatpush1.msra.mxu0 0.0
        %445 = vmatprep.subr.mxu0 0.0
        %446 = vmatpush1.msra.mxu0 0.0
        %447 = vmatprep.subr.mxu0 0.0
        %448 = vmatpush1.msra.mxu0 0.0
        %449 = vmatprep.subr.mxu0 0.0
        %450 = vmatpush1.msra.mxu0 0.0
        %451 = vmatprep.subr.mxu0 0.0
        %452 = vmatpush1.msra.mxu0 0.0
        %453 = vmatprep.subr.mxu0 0.0
        %454 = vmatpush1.msra.mxu0 0.0
        %455 = vmatprep.subr.mxu0 0.0
        %456 = vmatpush1.msra.mxu0 0.0
        %457 = vmatprep.subr.mxu0 0.0
        %458 = vmatpush1.msra.mxu0 0.0
        %459 = vmatprep.subr.mxu0 0.0
        %460 = vmatpush1.msra.mxu0 0.0
        %461 = vmatprep.subr.mxu0 0.0
        %462 = vmatpush1.msra.mxu0 0.0
        %463 = vmatprep.subr.mxu0 0.0
        %464 = vmatpush1.msra.mxu0 0.0
        %465 = vmatprep.subr.mxu0 0.0
        %466 = vmatpush1.msra.mxu0 0.0
        %467 = vmatprep.subr.mxu0 0.0
        %468 = vmatpush1.msra.mxu0 0.0
        %469 = vmatprep.subr.mxu0 0.0
        %470 = vmatpush1.msra.mxu0 0.0
        %471 = vmatprep.subr.mxu0 0.0
        %472 = vmatpush1.msra.mxu0 0.0
        %473 = vmatprep.subr.mxu0 0.0
        %474 = vmatpush1.msra.mxu0 0.0
        %475 = vmatprep.subr.mxu0 0.0
        %476 = vmatpush1.msra.mxu0 0.0
        %477 = vmatprep.subr.mxu0 0.0
        %478 = vmatpush1.msra.mxu0 0.0
        %479 = vmatprep.subr.mxu0 0.0
        %480 = vmatpush1.msra.mxu0 0.0
        %481 = vmatprep.subr.mxu0 0.0
        %482 = vmatpush1.msra.mxu0 0.0
        %483 = vmatprep.subr.mxu0 0.0
        %484 = vmatpush1.msra.mxu0 0.0
        %485 = vmatprep.subr.mxu0 0.0
        %486 = vmatpush1.msra.mxu0 0.0
        %487 = vmatprep.subr.mxu0 0.0
        %488 = vmatpush1.msra.mxu0 0.0
        %489 = vmatprep.mubr.f32.mxu0 0.0
        %490 = vmatmul.mubr.f32.gmra.mrb[0].mxu0 %v420
        %v491 = vpop.f32.mrb[0].mxu0
        %v492 = vadd.f32 0.0, %v491
        %v493 = vpop.f32.mrb[0].mxu0
        %494 = vmatprep.mubr.f32.mxu0 0.0
        %495 = vmatmul.mubr.f32.gmra.mrb[0].mxu0 %v423
        %v496 = vpop.f32.mrb[0].mxu0
        %v497 = vadd.f32 0.0, %v496
        %v498 = vpop.f32.mrb[0].mxu0
        %499 = vdwg.mxu0
        %v500 = vld [vmem:[%s360] sm:$0xff]
        %v501 = vld [vmem:[%s342] sm:$0xff]
        %v502 = vld [vmem:[%s342 + $0x8] sm:$0xff]
        %v503 = vld [vmem:[%s342 + $0x10] sm:$0xff]
        %v504 = vld [vmem:[%s342 + $0x18] sm:$0xff]
        %v505 = vld [vmem:[%s342 + $0x20] sm:$0xff]
        %v506 = vld [vmem:[%s342 + $0x28] sm:$0xff]
        %v507 = vld [vmem:[%s342 + $0x30] sm:$0xff]
        %v508 = vld [vmem:[%s342 + $0x38] sm:$0xff]
        %v509 = vld [vmem:[%s342 + $0x40] sm:$0xff]
        %v510 = vld [vmem:[%s342 + $0x48] sm:$0xff]
        %v511 = vld [vmem:[%s342 + $0x50] sm:$0xff]
        %v512 = vld [vmem:[%s342 + $0x58] sm:$0xff]
        %v513 = vld [vmem:[%s342 + $0x60] sm:$0xff]
        %v514 = vld [vmem:[%s342 + $0x68] sm:$0xff]
        %v515 = vld [vmem:[%s342 + $0x70] sm:$0xff]
        %v516 = vld [vmem:[%s342 + $0x78] sm:$0xff]
        %v517 = vlaneseq
        %v518 = vshrl.u32 %v517, 7
        %v519 = vsub.s32 0, %v518
        %v520 = vrot.slane %v500, %v519
        %521 = vmatprep.subr.mxu0 0.0
        %522 = vmatpush1.msra.mxu0 %v501
        %523 = vmatprep.subr.mxu0 0.0
        %524 = vmatpush1.msra.mxu0 %v502
        %525 = vmatprep.subr.mxu0 0.0
        %526 = vmatpush1.msra.mxu0 %v503
        %527 = vmatprep.subr.mxu0 0.0
        %528 = vmatpush1.msra.mxu0 %v504
        %529 = vmatprep.subr.mxu0 0.0
        %530 = vmatpush1.msra.mxu0 %v505
        %531 = vmatprep.subr.mxu0 0.0
        %532 = vmatpush1.msra.mxu0 %v506
        %533 = vmatprep.subr.mxu0 0.0
        %534 = vmatpush1.msra.mxu0 %v507
        %535 = vmatprep.subr.mxu0 0.0
        %536 = vmatpush1.msra.mxu0 %v508
        %537 = vmatprep.subr.mxu0 0.0
        %538 = vmatpush1.msra.mxu0 %v509
        %539 = vmatprep.subr.mxu0 0.0
        %540 = vmatpush1.msra.mxu0 %v510
        %541 = vmatprep.subr.mxu0 0.0
        %542 = vmatpush1.msra.mxu0 %v511
        %543 = vmatprep.subr.mxu0 0.0
        %544 = vmatpush1.msra.mxu0 %v512
        %545 = vmatprep.subr.mxu0 0.0
        %546 = vmatpush1.msra.mxu0 %v513
        %547 = vmatprep.subr.mxu0 0.0
        %548 = vmatpush1.msra.mxu0 %v514
        %549 = vmatprep.subr.mxu0 0.0
        %550 = vmatpush1.msra.mxu0 %v515
        %551 = vmatprep.subr.mxu0 0.0
        %552 = vmatpush1.msra.mxu0 %v516
        %553 = vmatprep.subr.mxu0 0.0
        %554 = vmatpush1.msra.mxu0 0.0
        %555 = vmatprep.subr.mxu0 0.0
        %556 = vmatpush1.msra.mxu0 0.0
        %557 = vmatprep.subr.mxu0 0.0
        %558 = vmatpush1.msra.mxu0 0.0
        %559 = vmatprep.subr.mxu0 0.0
        %560 = vmatpush1.msra.mxu0 0.0
        %561 = vmatprep.subr.mxu0 0.0
        %562 = vmatpush1.msra.mxu0 0.0
        %563 = vmatprep.subr.mxu0 0.0
        %564 = vmatpush1.msra.mxu0 0.0
        %565 = vmatprep.subr.mxu0 0.0
        %566 = vmatpush1.msra.mxu0 0.0
        %567 = vmatprep.subr.mxu0 0.0
        %568 = vmatpush1.msra.mxu0 0.0
        %569 = vmatprep.subr.mxu0 0.0
        %570 = vmatpush1.msra.mxu0 0.0
        %571 = vmatprep.subr.mxu0 0.0
        %572 = vmatpush1.msra.mxu0 0.0
        %573 = vmatprep.subr.mxu0 0.0
        %574 = vmatpush1.msra.mxu0 0.0
        %575 = vmatprep.subr.mxu0 0.0
        %576 = vmatpush1.msra.mxu0 0.0
        %577 = vmatprep.subr.mxu0 0.0
        %578 = vmatpush1.msra.mxu0 0.0
        %579 = vmatprep.subr.mxu0 0.0
        %580 = vmatpush1.msra.mxu0 0.0
        %581 = vmatprep.subr.mxu0 0.0
        %582 = vmatpush1.msra.mxu0 0.0
        %583 = vmatprep.subr.mxu0 0.0
        %584 = vmatpush1.msra.mxu0 0.0
        %585 = vmatprep.mubr.f32.mxu0 0.0
        %586 = vmatmul.mubr.f32.gmra.mrb[0].mxu0 %v492
        %v587 = vpop.f32.mrb[0].mxu0
        %v588 = vadd.f32 %v520, %v587
        %v589 = vpop.f32.mrb[0].mxu0
        %590 = vmatprep.mubr.f32.mxu0 0.0
        %591 = vmatmul.mubr.f32.gmra.mrb[0].mxu0 %v497
        %v592 = vpop.f32.mrb[0].mxu0
        %v593 = vadd.f32 %v520, %v592
        %v594 = vpop.f32.mrb[0].mxu0
        %595 = vdwg.mxu0
        %v596 = vmax.f32 %v588, 0.0
        %v597 = vmax.f32 %v593, 0.0
        %v598 = vld [vmem:[%s351] sm:$0xff]
        %v599 = vld [vmem:[%s351 + $0x8] sm:$0xff]
        %v600 = vld [vmem:[%s351 + $0x10] sm:$0xff]
        %v601 = vld [vmem:[%s351 + $0x18] sm:$0xff]
        %v602 = vld [vmem:[%s351 + $0x20] sm:$0xff]
        %v603 = vld [vmem:[%s351 + $0x28] sm:$0xff]
        %v604 = vld [vmem:[%s351 + $0x30] sm:$0xff]
        %v605 = vld [vmem:[%s351 + $0x38] sm:$0xff]
        %v606 = vld [vmem:[%s351 + $0x40] sm:$0xff]
        %v607 = vld [vmem:[%s351 + $0x48] sm:$0xff]
        %v608 = vld [vmem:[%s351 + $0x50] sm:$0xff]
        %v609 = vld [vmem:[%s351 + $0x58] sm:$0xff]
        %v610 = vld [vmem:[%s351 + $0x60] sm:$0xff]
        %v611 = vld [vmem:[%s351 + $0x68] sm:$0xff]
        %v612 = vld [vmem:[%s351 + $0x70] sm:$0xff]
        %v613 = vld [vmem:[%s351 + $0x78] sm:$0xff]
        %v614 = vlaneseq
        %v615 = vshrl.u32 %v614, 7
        %v616 = vsub.s32 1, %v615
        %v617 = vrot.slane %v500, %v616
        %618 = vmatprep.subr.mxu0 0.0
        %619 = vmatpush1.msra.mxu0 %v598
        %620 = vmatprep.subr.mxu0 0.0
        %621 = vmatpush1.msra.mxu0 %v599
        %622 = vmatprep.subr.mxu0 0.0
        %623 = vmatpush1.msra.mxu0 %v600
        %624 = vmatprep.subr.mxu0 0.0
        %625 = vmatpush1.msra.mxu0 %v601
        %626 = vmatprep.subr.mxu0 0.0
        %627 = vmatpush1.msra.mxu0 %v602
        %628 = vmatprep.subr.mxu0 0.0
        %629 = vmatpush1.msra.mxu0 %v603
        %630 = vmatprep.subr.mxu0 0.0
        %631 = vmatpush1.msra.mxu0 %v604
        %632 = vmatprep.subr.mxu0 0.0
        %633 = vmatpush1.msra.mxu0 %v605
        %634 = vmatprep.subr.mxu0 0.0
        %635 = vmatpush1.msra.mxu0 %v606
        %636 = vmatprep.subr.mxu0 0.0
        %637 = vmatpush1.msra.mxu0 %v607
        %638 = vmatprep.subr.mxu0 0.0
        %639 = vmatpush1.msra.mxu0 %v608
        %640 = vmatprep.subr.mxu0 0.0
        %641 = vmatpush1.msra.mxu0 %v609
        %642 = vmatprep.subr.mxu0 0.0
        %643 = vmatpush1.msra.mxu0 %v610
        %644 = vmatprep.subr.mxu0 0.0
        %645 = vmatpush1.msra.mxu0 %v611
        %646 = vmatprep.subr.mxu0 0.0
        %647 = vmatpush1.msra.mxu0 %v612
        %648 = vmatprep.subr.mxu0 0.0
        %649 = vmatpush1.msra.mxu0 %v613
        %650 = vmatprep.subr.mxu0 0.0
        %651 = vmatpush1.msra.mxu0 0.0
        %652 = vmatprep.subr.mxu0 0.0
        %653 = vmatpush1.msra.mxu0 0.0
        %654 = vmatprep.subr.mxu0 0.0
        %655 = vmatpush1.msra.mxu0 0.0
        %656 = vmatprep.subr.mxu0 0.0
        %657 = vmatpush1.msra.mxu0 0.0
        %658 = vmatprep.subr.mxu0 0.0
        %659 = vmatpush1.msra.mxu0 0.0
        %660 = vmatprep.subr.mxu0 0.0
        %661 = vmatpush1.msra.mxu0 0.0
        %662 = vmatprep.subr.mxu0 0.0
        %663 = vmatpush1.msra.mxu0 0.0
        %664 = vmatprep.subr.mxu0 0.0
        %665 = vmatpush1.msra.mxu0 0.0
        %666 = vmatprep.subr.mxu0 0.0
        %667 = vmatpush1.msra.mxu0 0.0
        %668 = vmatprep.subr.mxu0 0.0
        %669 = vmatpush1.msra.mxu0 0.0
        %670 = vmatprep.subr.mxu0 0.0
        %671 = vmatpush1.msra.mxu0 0.0
        %672 = vmatprep.subr.mxu0 0.0
        %673 = vmatpush1.msra.mxu0 0.0
        %674 = vmatprep.subr.mxu0 0.0
        %675 = vmatpush1.msra.mxu0 0.0
        %676 = vmatprep.subr.mxu0 0.0
        %677 = vmatpush1.msra.mxu0 0.0
        %678 = vmatprep.subr.mxu0 0.0
        %679 = vmatpush1.msra.mxu0 0.0
        %680 = vmatprep.subr.mxu0 0.0
        %681 = vmatpush1.msra.mxu0 0.0
        %682 = vmatprep.mubr.f32.mxu0 0.0
        %683 = vmatmul.mubr.f32.gmra.mrb[0].mxu0 %v596
        %v684 = vpop.f32.mrb[0].mxu0
        %v685 = vadd.f32 %v617, %v684
        %v686 = vpop.f32.mrb[0].mxu0
        %687 = vmatprep.mubr.f32.mxu0 0.0
        %688 = vmatmul.mubr.f32.gmra.mrb[0].mxu0 %v597
        %v689 = vpop.f32.mrb[0].mxu0
        %v690 = vadd.f32 %v617, %v689
        %v691 = vpop.f32.mrb[0].mxu0
        %692 = vdwg.mxu0
        %v693 = vmax.f32 %v685, 0.0
        %v694 = vmax.f32 %v690, 0.0
        %v695 = vadd.f32 %v693, %v694
        %v696 = vrot.slane %v695, 4
        %v697 = vadd.f32 %v695, %v696
        %v698 = vrot.slane %v697, 2
        %v699 = vadd.f32 %v697, %v698
        %v700 = vrot.slane %v699, 1
        %v701 = vadd.f32 %v699, %v700
        %v702 = vrcp.pop 16.0
        %v703 = vmul.f32 %v701, %v702
        %v704 = vsub.f32 %v693, %v703
        %v705 = vsub.f32 %v694, %v703
        %v706 = vmul.f32 %v704, %v704
        %v707 = vmul.f32 %v705, %v705
        %v708 = vadd.f32 %v706, %v707
        %v709 = vrot.slane %v708, 4
        %v710 = vadd.f32 %v708, %v709
        %v711 = vrot.slane %v710, 2
        %v712 = vadd.f32 %v710, %v711
        %v713 = vrot.slane %v712, 1
        %v714 = vadd.f32 %v712, %v713
        %v715 = vmul.f32 %v714, %v702
        %v716 = vadd.f32 %v715, 1e-05
        %v717 = vrsqrt.pop %v716
        %v718 = vmul.f32 %v500, %v717
        %v719 = vmul.f32 %v703, %v718
        %v721 = vrot.slane %v719, 7
        %v723 = vsub.f32 %v500, %v721
        %v724 = vlaneseq
        %v725 = vshrl.u32 %v724, 7
        %v726 = vsub.s32 2, %v725
        %v727 = vrot.slane %v718, %v726
        %v728 = vmul.f32 %v693, %v727
        %v729 = vmul.f32 %v694, %v727
        %v730 = vlaneseq
        %v731 = vshrl.u32 %v730, 7
        %v732 = vsub.s32 3, %v731
        %v733 = vrot.slane %v723, %v732
        %v734 = vadd.f32 %v728, %v733
        %v735 = vadd.f32 %v729, %v733
        %736 = vst [vmem:[%s398] sm:$0xff] %v734
        %737 = vst [vmem:[%s398 + $0x8] sm:$0xff] %v735
        %v738 = vld [vmem:[%s2] sm:$0xf]
        %v739 = vunpack.c.l.bf16 %v738
        %v741 = vsel %vm418, %v739, 0
        %743 = vmatprep.subr.mxu0 0.0
        %744 = vmatpush1.msra.mxu0 %v734
        %745 = vmatprep.subr.mxu0 0.0
        %746 = vmatpush1.msra.mxu0 %v735
        %747 = vmatprep.subr.mxu0 0.0
        %748 = vmatpush1.msra.mxu0 0.0
        %749 = vmatprep.subr.mxu0 0.0
        %750 = vmatpush1.msra.mxu0 0.0
        %751 = vmatprep.subr.mxu0 0.0
        %752 = vmatpush1.msra.mxu0 0.0
        %753 = vmatprep.subr.mxu0 0.0
        %754 = vmatpush1.msra.mxu0 0.0
        %755 = vmatprep.subr.mxu0 0.0
        %756 = vmatpush1.msra.mxu0 0.0
        %757 = vmatprep.subr.mxu0 0.0
        %758 = vmatpush1.msra.mxu0 0.0
        %759 = vmatprep.subr.mxu0 0.0
        %760 = vmatpush1.msra.mxu0 0.0
        %761 = vmatprep.subr.mxu0 0.0
        %762 = vmatpush1.msra.mxu0 0.0
        %763 = vmatprep.subr.mxu0 0.0
        %764 = vmatpush1.msra.mxu0 0.0
        %765 = vmatprep.subr.mxu0 0.0
        %766 = vmatpush1.msra.mxu0 0.0
        %767 = vmatprep.subr.mxu0 0.0
        %768 = vmatpush1.msra.mxu0 0.0
        %769 = vmatprep.subr.mxu0 0.0
        %770 = vmatpush1.msra.mxu0 0.0
        %771 = vmatprep.subr.mxu0 0.0
        %772 = vmatpush1.msra.mxu0 0.0
        %773 = vmatprep.subr.mxu0 0.0
        %774 = vmatpush1.msra.mxu0 0.0
        %775 = vmatprep.subr.mxu0 0.0
        %776 = vmatpush1.msra.mxu0 0.0
        %777 = vmatprep.subr.mxu0 0.0
        %778 = vmatpush1.msra.mxu0 0.0
        %779 = vmatprep.subr.mxu0 0.0
        %780 = vmatpush1.msra.mxu0 0.0
        %781 = vmatprep.subr.mxu0 0.0
        %782 = vmatpush1.msra.mxu0 0.0
        %783 = vmatprep.subr.mxu0 0.0
        %784 = vmatpush1.msra.mxu0 0.0
        %785 = vmatprep.subr.mxu0 0.0
        %786 = vmatpush1.msra.mxu0 0.0
        %787 = vmatprep.subr.mxu0 0.0
        %788 = vmatpush1.msra.mxu0 0.0
        %789 = vmatprep.subr.mxu0 0.0
        %790 = vmatpush1.msra.mxu0 0.0
        %791 = vmatprep.subr.mxu0 0.0
        %792 = vmatpush1.msra.mxu0 0.0
        %793 = vmatprep.subr.mxu0 0.0
        %794 = vmatpush1.msra.mxu0 0.0
        %795 = vmatprep.subr.mxu0 0.0
        %796 = vmatpush1.msra.mxu0 0.0
        %797 = vmatprep.subr.mxu0 0.0
        %798 = vmatpush1.msra.mxu0 0.0
        %799 = vmatprep.subr.mxu0 0.0
        %800 = vmatpush1.msra.mxu0 0.0
        %801 = vmatprep.subr.mxu0 0.0
        %802 = vmatpush1.msra.mxu0 0.0
        %803 = vmatprep.subr.mxu0 0.0
        %804 = vmatpush1.msra.mxu0 0.0
        %805 = vmatprep.subr.mxu0 0.0
        %806 = vmatpush1.msra.mxu0 0.0
        %807 = vmatprep.mubr.f32.mxu0 0.0
        %808 = vmatmul.mubr.f32.gmra.mrb[0].mxu0 %v741
        %v809 = vpop.f32.mrb[0].mxu0
        %v810 = vadd.f32 0.0, %v809
        %v811 = vpop.f32.mrb[0].mxu0
        %812 = vdwg.mxu0
        %813 = vst [vmem:[%s405] sm:$0xff] %v810
        %814 = vst [vmem:[#allocation2] sm:$0xff] %v734
        %815 = vst [vmem:[#allocation2 + $0x8] sm:$0xff] %v735
        %s816 = sand.u32 %s176, 1
        %s817 = scalar_lea.sflag [#allocation5], %s816
        %s818 = sand.u32 %s176, 1
        %s819 = smul.addr %s818, 16
        %s820 = scalar_lea.vmem [#allocation11], %s819
        %s821 = sand.u32 %s202, 1
        %s822 = scalar_lea.sflag [#allocation13], %s821
        %s823 = sand.u32 %s202, 1
        %s824 = smul.addr %s823, 8
        %s825 = scalar_lea.vmem [#allocation12], %s824
        // Predicated region
        $region69: #{tpu_custom_call.1} parent=43 // pred_check
          %p826 = pneg %p186
        $region70: #{tpu_custom_call.1} parent=43 // pred_check_branch
          %828 = sbr.rel (%p826) target = $region72
        $region71: #{tpu_custom_call.1} parent=43 // pred_region
          %s830 = ssub.s32 256, 256
          %831 = vsyncadd %s817, %s830
          %s832 = smul.addr %s27, 2
          %s833 = smul.addr %s832, 128
          %s834 = scalar_lea.hbm %s6, %s833
          %s835 = sshll.u32 %s820, 4
          %s836 = int_to_ptr.vmem [resolvable:$true] %s835
          %841 = dma.vmem_to_hbm [thread:$0]  %s836, 256, %s834, %s817, 128, 128, 8
        $region72: #{tpu_custom_call.1} parent=43 // pred_fallthru
          _
        // Predicated region
        $region73: #{tpu_custom_call.1} parent=43 // pred_check
          %p842 = pneg %p212
        $region74: #{tpu_custom_call.1} parent=43 // pred_check_branch
          %844 = sbr.rel (%p842) target = $region76
        $region75: #{tpu_custom_call.1} parent=43 // pred_region
          %s846 = ssub.s32 128, 128
          %847 = vsyncadd %s822, %s846
          %s848 = smul.addr %s27, 128
          %s849 = scalar_lea.hbm %s7, %s848
          %s851 = sshll.u32 %s825, 4
          %s852 = int_to_ptr.vmem [resolvable:$true] %s851
          %854 = dma.vmem_to_hbm [thread:$0]  %s852, 128, %s849, %s822
        $region76: #{tpu_custom_call.1} parent=43 // pred_fallthru
          _
      $region44: #{tpu_custom_call.1} parent=5 // pred_fallthru
        _
      %p855 = scmp.le.s32.totalorder 2, %s22
      // Predicated region
      $region77: #{tpu_custom_call.1} parent=5 // pred_check
        %p856 = pneg %p855
      $region78: #{tpu_custom_call.1} parent=5 // pred_check_branch
        %858 = sbr.rel (%p856) target = $region80
      $region79: #{tpu_custom_call.1} parent=5 // pred_region
        %s859 = ssub.s32 %s22, 2
        // Predicated region
        $region81: #{tpu_custom_call.1} parent=79 // pred_check
          %p860 = pneg %p192
        $region82: #{tpu_custom_call.1} parent=79 // pred_check_branch
          %862 = sbr.rel (%p860) target = $region84
        $region83: #{tpu_custom_call.1} parent=79 // pred_region
          %s863 = sand.u32 %s177, 1
          %s864 = scalar_lea.sflag [#allocation5], %s863
          %s865 = sand.u32 %s177, 1
          %s866 = smul.addr %s865, 16
          %s867 = scalar_lea.vmem [#allocation11], %s866
          %868 = dma.done %s864, 256
        $region84: #{tpu_custom_call.1} parent=79 // pred_fallthru
          _
        // Predicated region
        $region85: #{tpu_custom_call.1} parent=79 // pred_check
          %p869 = pneg %p218
        $region86: #{tpu_custom_call.1} parent=79 // pred_check_branch
          %871 = sbr.rel (%p869) target = $region88
        $region87: #{tpu_custom_call.1} parent=79 // pred_region
          %s872 = sand.u32 %s203, 1
          %s873 = scalar_lea.sflag [#allocation13], %s872
          %s874 = sand.u32 %s203, 1
          %s875 = smul.addr %s874, 8
          %s876 = scalar_lea.vmem [#allocation12], %s875
          %877 = dma.done %s873, 128
        $region88: #{tpu_custom_call.1} parent=79 // pred_fallthru
          _
      $region80: #{tpu_custom_call.1} parent=5 // pred_fallthru
        _
    $region6: #{tpu_custom_call.1} parent=1 // loop_footer
      %s26 = sadd.s32 1, %s22
    $region7: #{tpu_custom_call.1} parent=1 // loop_footer_branch
      %21 = sbr.rel target = $region3
    $region8: #{tpu_custom_call.1} parent=1 // loop_exit
      _
    %878 = vsyncpa [#allocation4], 1
    %s879 = scalar_lea.sflag [#allocation4], 1
    %880 = vsyncpa %s879, 1
    %881 = vsyncpa [#allocation7], 1
    %882 = vsyncpa [#allocation5], 1
    %s883 = scalar_lea.sflag [#allocation5], 1
    %884 = vsyncpa %s883, 1
    %885 = vsyncpa [#allocation13], 1
    %s886 = scalar_lea.sflag [#allocation13], 1
    %887 = vsyncpa %s886, 1

</llo_original>
